<compile_context>
chip_gen: v5e
topology: v5e:2x2
jax: 0.10.0
libtpu: 0.0.40
codegen_flags: <defaults>
</compile_context>

<pallas_src>
import jax
import jax.numpy as jnp
from jax.experimental import pallas as pl
from jax.experimental.pallas import tpu as pltpu


# ------------------------------------------------------------------ kernel ----
def gru_dec_kernel(x_ref, h0_ref, wx_ref, wh_ref, bg_ref, wfc_ref, bfc_ref,
                   out_ref, hT_ref, h_vmem):
    t = pl.program_id(0)
    H = h0_ref.shape[-1]

    # Load the initial hidden state into the VMEM-resident carry once.
    @pl.when(t == 0)
    def _():
        h_vmem[...] = h0_ref[...]

    x = x_ref[0]                      # (B, C)  f32
    h = h_vmem[...]                   # (B, H)  f32
    bg = bg_ref[...]                  # (2, 3H) f32: row0 = b_x (emb+ih), row1 = b_hh

    # Two matmuls over the full 3H gate width (emb folded into wx at pack time).
    gx = jnp.dot(x, wx_ref[...], preferred_element_type=jnp.float32) + bg[0:1, :]
    gh = jnp.dot(h, wh_ref[...], preferred_element_type=jnp.float32) + bg[1:2, :]

    # PyTorch GRU gate equations, gate order [r | z | n]; in-vreg lane slices.
    r = jax.nn.sigmoid(gx[:, :H] + gh[:, :H])
    z = jax.nn.sigmoid(gx[:, H:2 * H] + gh[:, H:2 * H])
    n = jnp.tanh(gx[:, 2 * H:] + r * gh[:, 2 * H:])
    h_new = (1.0 - z) * n + z * h                                       # (B, H) f32

    # fc + LogSoftmax(dim=1), lane-dense (C padded to 128; pad logits ~ -1e30).
    logits = jnp.dot(h_new, wfc_ref[...],
                     preferred_element_type=jnp.float32) + bfc_ref[...]  # (B, C_pad)
    m = jnp.max(logits, axis=-1, keepdims=True)
    shifted = logits - m
    lse = jnp.log(jnp.sum(jnp.exp(shifted), axis=-1, keepdims=True))

    out_ref[0] = shifted - lse
    h_vmem[...] = h_new

    # Write the hidden state back to HBM only on the last decode step.
    @pl.when(t == pl.num_programs(0) - 1)
    def _():
        hT_ref[...] = h_new


# ---------------------------------------------------------------- wrappers ----
def gru_dec_decode(x_seq, h0, params):
    """Run T decode steps inside one pallas_call.

    x_seq: (T, B, C) f32, h0: (B, H) f32.
    Returns (log_probs (T, B, C) f32, h_T (B, H) f32)."""
    T, B, C = x_seq.shape
    H = h0.shape[-1]
    H3 = 3 * H
    C_pad = params["w_fc"].shape[-1]

    flops = 2 * T * B * (C * H3 + H * H3 + H * C_pad)
    transcendentals = T * B * (3 * H + C_pad + 1)
    weight_bytes = 4 * (C * H3 + H * H3 + 2 * H3 + H * C_pad + C_pad)
    act_bytes = 4 * (T * B * C + T * B * C_pad + 2 * B * H)
    cost = pl.CostEstimate(flops=flops, transcendentals=transcendentals,
                           bytes_accessed=weight_bytes + act_bytes)

    grid_spec = pltpu.PrefetchScalarGridSpec(
        num_scalar_prefetch=0,
        grid=(T,),
        in_specs=[
            pl.BlockSpec((1, B, C), lambda t: (t, 0, 0)),       # x_t (streamed)
            pl.BlockSpec((B, H), lambda t: (0, 0)),             # h0 (resident)
            pl.BlockSpec((C, H3), lambda t: (0, 0)),            # w_x (resident)
            pl.BlockSpec((H, H3), lambda t: (0, 0)),            # w_h (resident)
            pl.BlockSpec((2, H3), lambda t: (0, 0)),            # gate biases (resident)
            pl.BlockSpec((H, C_pad), lambda t: (0, 0)),         # w_fc (resident)
            pl.BlockSpec((1, C_pad), lambda t: (0, 0)),         # b_fc (resident)
        ],
        out_specs=(
            pl.BlockSpec((1, B, C_pad), lambda t: (t, 0, 0)),   # per-step log-probs
            pl.BlockSpec((B, H), lambda t: (0, 0)),             # final hidden state
        ),
        scratch_shapes=[pltpu.VMEM((B, H), jnp.float32)],       # h carry
    )

    out_pad, h_T = pl.pallas_call(
        gru_dec_kernel,
        out_shape=(jax.ShapeDtypeStruct((T, B, C_pad), jnp.float32),
                   jax.ShapeDtypeStruct((B, H), jnp.float32)),
        grid_spec=grid_spec,
        compiler_params=pltpu.CompilerParams(dimension_semantics=("arbitrary",)),
        cost_estimate=cost,
    )(x_seq, h0, params["w_x"], params["w_h"], params["b_gates"],
      params["w_fc"], params["b_fc"])

    return out_pad[..., :C], h_T


def gru_dec_forward(x, h, params):
    """Matches GRU_DEC.forward: x (B, C), h (num_layers=1, B, H).
    Returns (log_probs (B, C), h_out (1, B, H))."""
    B, C = x.shape
    H = h.shape[-1]
    out_seq, h_T = gru_dec_decode(x[None], h.reshape(B, H), params)
    return out_seq[0], h_T.reshape(1, B, H)


# ------------------------------------------------------------------ params ----
def init_raw_params(key, num_classes, hidden_size):
    """PyTorch-equivalent parameters, stored transposed: (in_features, out_features)."""
    ks = jax.random.split(key, 8)
    s = 0.1
    return {
        "w_emb_t": s * jax.random.normal(ks[0], (num_classes, hidden_size), jnp.float32),
        "b_emb":   s * jax.random.normal(ks[1], (1, hidden_size), jnp.float32),
        "w_ih_t":  s * jax.random.normal(ks[2], (hidden_size, 3 * hidden_size), jnp.float32),
        "b_ih":    s * jax.random.normal(ks[3], (1, 3 * hidden_size), jnp.float32),
        "w_hh_t":  s * jax.random.normal(ks[4], (hidden_size, 3 * hidden_size), jnp.float32),
        "b_hh":    s * jax.random.normal(ks[5], (1, 3 * hidden_size), jnp.float32),
        "w_fc_t":  s * jax.random.normal(ks[6], (hidden_size, num_classes), jnp.float32),
        "b_fc":    s * jax.random.normal(ks[7], (1, num_classes), jnp.float32),
    }


def pack_params(raw, c_pad=128):
    """Fold emb into the GRU input projection, keep per-gate slabs fused (C,3H)/(H,3H),
    pack gate biases into one (2,3H) buffer, pad fc to 128 lanes.  All f32."""
    H = raw["w_hh_t"].shape[0]
    C = raw["w_fc_t"].shape[1]

    # gx = (x @ W_emb + b_emb) @ W_ih + b_ih = x @ (W_emb @ W_ih) + (b_emb @ W_ih + b_ih)
    w_x = raw["w_emb_t"] @ raw["w_ih_t"]                       # (C, 3H)
    b_x = raw["b_emb"] @ raw["w_ih_t"] + raw["b_ih"]           # (1, 3H)
    b_gates = jnp.concatenate([b_x, raw["b_hh"]], axis=0)      # (2, 3H)

    w_fc = jnp.zeros((H, c_pad), jnp.float32).at[:, :C].set(raw["w_fc_t"])
    b_fc = jnp.full((1, c_pad), -1e30, jnp.float32).at[:, :C].set(raw["b_fc"])

    return {
        "w_x": w_x.astype(jnp.float32),
        "w_h": raw["w_hh_t"].astype(jnp.float32),
        "b_gates": b_gates.astype(jnp.float32),
        "w_fc": w_fc,
        "b_fc": b_fc,
    }


# --------------------------------------------------------------- reference ----
def gru_dec_reference_step(x, h, raw):
    """Pure-JAX f32 reference matching the PyTorch module (single step)."""
    H = h.shape[-1]
    emb = x @ raw["w_emb_t"] + raw["b_emb"]
    gx = emb @ raw["w_ih_t"] + raw["b_ih"]
    gh = h @ raw["w_hh_t"] + raw["b_hh"]
    r = jax.nn.sigmoid(gx[:, :H] + gh[:, :H])
    z = jax.nn.sigmoid(gx[:, H:2 * H] + gh[:, H:2 * H])
    n = jnp.tanh(gx[:, 2 * H:] + r * gh[:, 2 * H:])
    h_new = (1.0 - z) * n + z * h
    logits = h_new @ raw["w_fc_t"] + raw["b_fc"]
    return jax.nn.log_softmax(logits, axis=-1), h_new


# -------------------------------------------------------------------- main ----
if __name__ == "__main__":
    batch = 8
    hidden_size = 32
    num_classes = 10
    num_layers = 1
    seq_len = 8

    key = jax.random.PRNGKey(0)
    kx, kh, kp = jax.random.split(key, 3)

    # x plays the role of a (soft) one-hot class vector fed to the decoder embedding.
    x_seq = jax.random.normal(kx, (seq_len, batch, num_classes), jnp.float32)
    h0 = jax.random.normal(kh, (num_layers, batch, hidden_size), jnp.float32)

    raw = init_raw_params(kp, num_classes, hidden_size)
    params = pack_params(raw)

    # ---- Single-step forward (matches the PyTorch module's forward). ----
    fwd = jax.jit(gru_dec_forward)
    out1, h1 = fwd(x_seq[0], h0, params)
    jax.block_until_ready((out1, h1))

    assert out1.shape == (batch, num_classes)
    assert h1.shape == (num_layers, batch, hidden_size)
    # log-softmax rows should sum to ~1 in prob space
    assert jnp.allclose(jnp.sum(jnp.exp(out1), axis=1), 1.0, atol=1e-4)

    ref_out1, ref_h1 = gru_dec_reference_step(
        x_seq[0], h0.reshape(batch, hidden_size), raw)
    assert jnp.allclose(out1, ref_out1, atol=1e-3), \
        float(jnp.max(jnp.abs(out1 - ref_out1)))
    assert jnp.allclose(h1.reshape(batch, hidden_size), ref_h1, atol=1e-3)

    # ---- Multi-step decode: the whole T-step loop runs in one pallas_call. ----
    dec = jax.jit(gru_dec_decode)
    out_seq, h_T = dec(x_seq, h0.reshape(batch, hidden_size), params)
    jax.block_until_ready((out_seq, h_T))

    ref_outs = []
    h_ref = h0.reshape(batch, hidden_size)
    for t in range(seq_len):
        o, h_ref = gru_dec_reference_step(x_seq[t], h_ref, raw)
        ref_outs.append(o)
    ref_out_seq = jnp.stack(ref_outs)

    assert out_seq.shape == (seq_len, batch, num_classes)
    assert jnp.allclose(out_seq, ref_out_seq, atol=1e-3), \
        float(jnp.max(jnp.abs(out_seq - ref_out_seq)))
    assert jnp.allclose(h_T, h_ref, atol=1e-3)

    print("KERNEL_OK")
</pallas_src>

<mosaic_0001>
module attributes {stable_mosaic.version = 11 : i64} {
  func.func @gru_dec_kernel(%arg0: i32, %arg1: memref<1x8x10xf32, #tpu.memory_space<vmem>>, %arg2: memref<8x32xf32, #tpu.memory_space<vmem>>, %arg3: memref<10x96xf32, #tpu.memory_space<vmem>>, %arg4: memref<32x96xf32, #tpu.memory_space<vmem>>, %arg5: memref<2x96xf32, #tpu.memory_space<vmem>>, %arg6: memref<32x128xf32, #tpu.memory_space<vmem>>, %arg7: memref<1x128xf32, #tpu.memory_space<vmem>>, %arg8: memref<1x8x128xf32, #tpu.memory_space<vmem>>, %arg9: memref<8x32xf32, #tpu.memory_space<vmem>>, %arg10: memref<8x32xf32, #tpu.memory_space<vmem>>) attributes {dimension_semantics = [#tpu.dimension_semantics<arbitrary>], iteration_bounds = array<i64: 1>, scalar_prefetch = 0 : i64, scratch_operands = 1 : i64, tpu.core_type = #tpu.core_type<tc>, window_params = [{transform_indices = @transform_0, window_bounds = array<i64: 1, 8, 10>}, {pipeline_mode = #tpu.pipeline_mode<synchronous>, transform_indices = @transform_1, window_bounds = array<i64: 8, 32>}, {pipeline_mode = #tpu.pipeline_mode<synchronous>, transform_indices = @transform_2, window_bounds = array<i64: 10, 96>}, {pipeline_mode = #tpu.pipeline_mode<synchronous>, transform_indices = @transform_3, window_bounds = array<i64: 32, 96>}, {pipeline_mode = #tpu.pipeline_mode<synchronous>, transform_indices = @transform_4, window_bounds = array<i64: 2, 96>}, {pipeline_mode = #tpu.pipeline_mode<synchronous>, transform_indices = @transform_5, window_bounds = array<i64: 32, 128>}, {pipeline_mode = #tpu.pipeline_mode<synchronous>, transform_indices = @transform_6, window_bounds = array<i64: 1, 128>}, {transform_indices = @transform_7, window_bounds = array<i64: 1, 8, 128>}, {pipeline_mode = #tpu.pipeline_mode<synchronous>, transform_indices = @transform_8, window_bounds = array<i64: 8, 32>}]} {
    %c0_i32 = arith.constant 0 : i32
    %0 = arith.cmpi eq, %arg0, %c0_i32 : i32
    %1 = arith.extui %0 : i1 to i32
    %c0_i32_0 = arith.constant 0 : i32
    %2 = arith.cmpi ne, %1, %c0_i32_0 : i32
    scf.if %2 {
      %c0_29 = arith.constant 0 : index
      %c0_30 = arith.constant 0 : index
      %65 = vector.load %arg2[%c0_29, %c0_30] : memref<8x32xf32, #tpu.memory_space<vmem>>, vector<8x32xf32>
      %c0_31 = arith.constant 0 : index
      %c0_32 = arith.constant 0 : index
      %66 = vector.load %arg10[%c0_31, %c0_32] : memref<8x32xf32, #tpu.memory_space<vmem>>, vector<8x32xf32>
      tpu.vector_store %arg10[%c0_31, %c0_32], %65 {strides = array<i32>} : memref<8x32xf32, #tpu.memory_space<vmem>>, vector<8x32xf32>,
    } else {
    }
    %c0 = arith.constant 0 : index
    %c0_1 = arith.constant 0 : index
    %c0_2 = arith.constant 0 : index
    %3 = vector.load %arg1[%c0, %c0_1, %c0_2] : memref<1x8x10xf32, #tpu.memory_space<vmem>>, vector<1x8x10xf32>
    %4 = vector.shape_cast %3 : vector<1x8x10xf32> to vector<8x10xf32>
    %c0_3 = arith.constant 0 : index
    %c0_4 = arith.constant 0 : index
    %5 = vector.load %arg10[%c0_3, %c0_4] : memref<8x32xf32, #tpu.memory_space<vmem>>, vector<8x32xf32>
    %c0_5 = arith.constant 0 : index
    %c0_6 = arith.constant 0 : index
    %6 = vector.load %arg5[%c0_5, %c0_6] : memref<2x96xf32, #tpu.memory_space<vmem>>, vector<2x96xf32>
    %c0_7 = arith.constant 0 : index
    %c0_8 = arith.constant 0 : index
    %7 = vector.load %arg3[%c0_7, %c0_8] : memref<10x96xf32, #tpu.memory_space<vmem>>, vector<10x96xf32>
    %cst = arith.constant dense<0.000000e+00> : vector<8x96xf32>
    %8 = tpu.matmul %4, %7, %cst {dimension_numbers = #tpu.dot_dimension_numbers<[1], [0], [0], [1], [0, 0, 1, 1], [], []>} : vector<8x10xf32>, vector<10x96xf32>, vector<8x96xf32> -> vector<8x96xf32>
    %9 = vector.extract_strided_slice %6 {offsets = [0, 0], sizes = [1, 96], strides = [1, 1]} : vector<2x96xf32> to vector<1x96xf32>
    %10 = vector.broadcast %9 : vector<1x96xf32> to vector<8x96xf32>
    %11 = arith.addf %8, %10 : vector<8x96xf32>
    %c0_9 = arith.constant 0 : index
    %c0_10 = arith.constant 0 : index
    %12 = vector.load %arg4[%c0_9, %c0_10] : memref<32x96xf32, #tpu.memory_space<vmem>>, vector<32x96xf32>
    %cst_11 = arith.constant dense<0.000000e+00> : vector<8x96xf32>
    %13 = tpu.matmul %5, %12, %cst_11 {dimension_numbers = #tpu.dot_dimension_numbers<[1], [0], [0], [1], [0, 0, 1, 1], [], []>} : vector<8x32xf32>, vector<32x96xf32>, vector<8x96xf32> -> vector<8x96xf32>
    %14 = vector.extract_strided_slice %6 {offsets = [1, 0], sizes = [1, 96], strides = [1, 1]} : vector<2x96xf32> to vector<1x96xf32>
    %15 = vector.broadcast %14 : vector<1x96xf32> to vector<8x96xf32>
    %16 = arith.addf %13, %15 : vector<8x96xf32>
    %17 = vector.extract_strided_slice %11 {offsets = [0, 0], sizes = [8, 32], strides = [1, 1]} : vector<8x96xf32> to vector<8x32xf32>
    %18 = vector.extract_strided_slice %16 {offsets = [0, 0], sizes = [8, 32], strides = [1, 1]} : vector<8x96xf32> to vector<8x32xf32>
    %19 = arith.addf %17, %18 : vector<8x32xf32>
    %20 = arith.negf %19 : vector<8x32xf32>
    %21 = math.exp %20 : vector<8x32xf32>
    %cst_12 = arith.constant 1.000000e+00 : f32
    %22 = vector.broadcast %cst_12 : f32 to vector<8x32xf32>
    %23 = arith.addf %22, %21 : vector<8x32xf32>
    %24 = arith.divf %22, %23 : vector<8x32xf32>
    %25 = vector.extract_strided_slice %11 {offsets = [0, 32], sizes = [8, 32], strides = [1, 1]} : vector<8x96xf32> to vector<8x32xf32>
    %26 = vector.extract_strided_slice %16 {offsets = [0, 32], sizes = [8, 32], strides = [1, 1]} : vector<8x96xf32> to vector<8x32xf32>
    %27 = arith.addf %25, %26 : vector<8x32xf32>
    %28 = arith.negf %27 : vector<8x32xf32>
    %29 = math.exp %28 : vector<8x32xf32>
    %cst_13 = arith.constant 1.000000e+00 : f32
    %30 = vector.broadcast %cst_13 : f32 to vector<8x32xf32>
    %31 = arith.addf %30, %29 : vector<8x32xf32>
    %32 = arith.divf %30, %31 : vector<8x32xf32>
    %33 = vector.extract_strided_slice %11 {offsets = [0, 64], sizes = [8, 32], strides = [1, 1]} : vector<8x96xf32> to vector<8x32xf32>
    %34 = vector.extract_strided_slice %16 {offsets = [0, 64], sizes = [8, 32], strides = [1, 1]} : vector<8x96xf32> to vector<8x32xf32>
    %35 = arith.mulf %24, %34 : vector<8x32xf32>
    %36 = arith.addf %33, %35 : vector<8x32xf32>
    %37 = math.tanh %36 : vector<8x32xf32>
    %cst_14 = arith.constant 1.000000e+00 : f32
    %38 = vector.broadcast %cst_14 : f32 to vector<8x32xf32>
    %39 = arith.subf %38, %32 : vector<8x32xf32>
    %40 = arith.mulf %39, %37 : vector<8x32xf32>
    %41 = arith.mulf %32, %5 : vector<8x32xf32>
    %42 = arith.addf %40, %41 : vector<8x32xf32>
    %c0_15 = arith.constant 0 : index
    %c0_16 = arith.constant 0 : index
    %43 = vector.load %arg6[%c0_15, %c0_16] : memref<32x128xf32, #tpu.memory_space<vmem>>, vector<32x128xf32>
    %cst_17 = arith.constant dense<0.000000e+00> : vector<8x128xf32>
    %44 = tpu.matmul %42, %43, %cst_17 {dimension_numbers = #tpu.dot_dimension_numbers<[1], [0], [0], [1], [0, 0, 1, 1], [], []>} : vector<8x32xf32>, vector<32x128xf32>, vector<8x128xf32> -> vector<8x128xf32>
    %c0_18 = arith.constant 0 : index
    %c0_19 = arith.constant 0 : index
    %45 = vector.load %arg7[%c0_18, %c0_19] : memref<1x128xf32, #tpu.memory_space<vmem>>, vector<1x128xf32>
    %46 = vector.broadcast %45 : vector<1x128xf32> to vector<8x128xf32>
    %47 = arith.addf %44, %46 : vector<8x128xf32>
    %cst_20 = arith.constant dense<0xFF800000> : vector<8xf32>
    %48 = vector.multi_reduction <maximumf>, %47, %cst_20 [1] : vector<8x128xf32> to vector<8xf32>
    %49 = vector.shape_cast %48 : vector<8xf32> to vector<8x1xf32>
    %50 = vector.broadcast %49 : vector<8x1xf32> to vector<8x128xf32>
    %51 = arith.subf %47, %50 : vector<8x128xf32>
    %52 = math.exp %51 : vector<8x128xf32>
    %cst_21 = arith.constant dense<0.000000e+00> : vector<8xf32>
    %53 = vector.multi_reduction <add>, %52, %cst_21 [1] : vector<8x128xf32> to vector<8xf32>
    %54 = vector.shape_cast %53 : vector<8xf32> to vector<8x1xf32>
    %55 = math.log %54 : vector<8x1xf32>
    %56 = vector.broadcast %55 : vector<8x1xf32> to vector<8x128xf32>
    %57 = arith.subf %51, %56 : vector<8x128xf32>
    %c0_22 = arith.constant 0 : index
    %c0_23 = arith.constant 0 : index
    %c0_24 = arith.constant 0 : index
    %58 = vector.load %arg8[%c0_22, %c0_23, %c0_24] : memref<1x8x128xf32, #tpu.memory_space<vmem>>, vector<1x8x128xf32>
    %59 = vector.shape_cast %58 : vector<1x8x128xf32> to vector<8x128xf32>
    %60 = vector.shape_cast %57 : vector<8x128xf32> to vector<1x8x128xf32>
    tpu.vector_store %arg8[%c0_22, %c0_23, %c0_24], %60 {strides = array<i32>} : memref<1x8x128xf32, #tpu.memory_space<vmem>>, vector<1x8x128xf32>,
    %c0_25 = arith.constant 0 : index
    %c0_26 = arith.constant 0 : index
    %61 = vector.load %arg10[%c0_25, %c0_26] : memref<8x32xf32, #tpu.memory_space<vmem>>, vector<8x32xf32>
    tpu.vector_store %arg10[%c0_25, %c0_26], %42 {strides = array<i32>} : memref<8x32xf32, #tpu.memory_space<vmem>>, vector<8x32xf32>,
    %c0_i32_27 = arith.constant 0 : i32
    %62 = arith.cmpi eq, %arg0, %c0_i32_27 : i32
    %63 = arith.extui %62 : i1 to i32
    %c0_i32_28 = arith.constant 0 : i32
    %64 = arith.cmpi ne, %63, %c0_i32_28 : i32
    scf.if %64 {
      %c0_29 = arith.constant 0 : index
      %c0_30 = arith.constant 0 : index
      %65 = vector.load %arg9[%c0_29, %c0_30] : memref<8x32xf32, #tpu.memory_space<vmem>>, vector<8x32xf32>
      tpu.vector_store %arg9[%c0_29, %c0_30], %42 {strides = array<i32>} : memref<8x32xf32, #tpu.memory_space<vmem>>, vector<8x32xf32>,
    } else {
    }
    return
  }
  func.func @transform_0(%arg0: i32) -> (i32, i32, i32) {
    %c0_i32 = arith.constant 0 : i32
    %c0_i32_0 = arith.constant 0 : i32
    %c0_i32_1 = arith.constant 0 : i32
    return %arg0, %c0_i32, %c0_i32_0 : i32, i32, i32
  }
  func.func @transform_1(%arg0: i32) -> (i32, i32) {
    %c0_i32 = arith.constant 0 : i32
    %c0_i32_0 = arith.constant 0 : i32
    %c0_i32_1 = arith.constant 0 : i32
    return %c0_i32, %c0_i32_0 : i32, i32
  }
  func.func @transform_2(%arg0: i32) -> (i32, i32) {
    %c0_i32 = arith.constant 0 : i32
    %c0_i32_0 = arith.constant 0 : i32
    %c0_i32_1 = arith.constant 0 : i32
    return %c0_i32, %c0_i32_0 : i32, i32
  }
  func.func @transform_3(%arg0: i32) -> (i32, i32) {
    %c0_i32 = arith.constant 0 : i32
    %c0_i32_0 = arith.constant 0 : i32
    %c0_i32_1 = arith.constant 0 : i32
    return %c0_i32, %c0_i32_0 : i32, i32
  }
  func.func @transform_4(%arg0: i32) -> (i32, i32) {
    %c0_i32 = arith.constant 0 : i32
    %c0_i32_0 = arith.constant 0 : i32
    %c0_i32_1 = arith.constant 0 : i32
    return %c0_i32, %c0_i32_0 : i32, i32
  }
  func.func @transform_5(%arg0: i32) -> (i32, i32) {
    %c0_i32 = arith.constant 0 : i32
    %c0_i32_0 = arith.constant 0 : i32
    %c0_i32_1 = arith.constant 0 : i32
    return %c0_i32, %c0_i32_0 : i32, i32
  }
  func.func @transform_6(%arg0: i32) -> (i32, i32) {
    %c0_i32 = arith.constant 0 : i32
    %c0_i32_0 = arith.constant 0 : i32
    %c0_i32_1 = arith.constant 0 : i32
    return %c0_i32, %c0_i32_0 : i32, i32
  }
  func.func @transform_7(%arg0: i32) -> (i32, i32, i32) {
    %c0_i32 = arith.constant 0 : i32
    %c0_i32_0 = arith.constant 0 : i32
    %c0_i32_1 = arith.constant 0 : i32
    return %arg0, %c0_i32, %c0_i32_0 : i32, i32, i32
  }
  func.func @transform_8(%arg0: i32) -> (i32, i32) {
    %c0_i32 = arith.constant 0 : i32
    %c0_i32_0 = arith.constant 0 : i32
    %c0_i32_1 = arith.constant 0 : i32
    return %c0_i32, %c0_i32_0 : i32, i32
  }
}

</mosaic_0001>

<llo_original>
// kernel: gru_dec_forward.1
$region0: #{gru_dec_forward.1}
  #allocation0 [shape = 'u32[]', space=smem, size = 0x4, offset = 0x4, fixed_abs, tag = 'smem constant byte address 0x4 - core index']
  #allocation1 [shape = 'u32[72,128]{1,0:T(1,128)}', space=vmem, size = 0x9000, scoped, tag = 'internal scratch']
  #allocation2 [shape = 'f32[8,32]{1,0:T(8,128)}', space=vmem, size = 0x1000, scoped, tag = 'scratch operand']
  %s0 = inlined_call_operand.hbm [shape: f32[1,8,10], index: 0, kind: input, shape index: {}]
  %s1 = inlined_call_operand.hbm [shape: f32[8,32], index: 1, kind: input, shape index: {}]
  %s2 = inlined_call_operand.hbm [shape: f32[10,96], index: 2, kind: input, shape index: {}]
  %s3 = inlined_call_operand.hbm [shape: f32[32,96], index: 3, kind: input, shape index: {}]
  %s4 = inlined_call_operand.vmem [shape: f32[2,96], index: 4, kind: input, shape index: {}]
  %s5 = inlined_call_operand.hbm [shape: f32[32,128], index: 5, kind: input, shape index: {}]
  %s6 = inlined_call_operand.vmem [shape: f32[1,128], index: 6, kind: input, shape index: {}]
  %s7 = inlined_call_operand.vmem [shape: f32[1,8,128], index: 7, kind: output, shape index: {0}]
  %s8 = inlined_call_operand.hbm [shape: f32[8,32], index: 8, kind: output, shape index: {1}]
  %9 = xla_tuple %s7, %s8
  %s10 = sld [smem:[#allocation0]]
  $region74: #{gru_dec_forward.1} parent=0
    _
  %s12 = ssub.s32 1, %s10
  %s13 = scalar_select 0, %s12, %s10
  $region1: #{gru_dec_forward.1} parent=0
    #allocation3 [shape = 'u8[4096]{0}', space=vmem, size = 0x1000, scoped, tag = 'input window, operand 0, single buffered']
    #allocation4 [shape = 's32[1]{0}', space=sflag, size = 0x4, scoped, tag = 'scoped memory for gru_dec_forward.1']
    #allocation5 [shape = 's32[1]{0}', space=sflag, size = 0x4, scoped, tag = 'scoped memory for gru_dec_forward.1']
    #allocation6 [shape = 'u8[4096]{0}', space=vmem, size = 0x1000, scoped, tag = 'input window, operand 1, single buffered']
    #allocation7 [shape = 's32[1]{0}', space=sflag, size = 0x4, scoped, tag = 'scoped memory for gru_dec_forward.1']
    #allocation8 [shape = 'u8[8192]{0}', space=vmem, size = 0x2000, scoped, tag = 'input window, operand 2, single buffered']
    #allocation9 [shape = 'u8[16384]{0}', space=vmem, size = 0x4000, scoped, tag = 'input window, operand 3, single buffered']
    #allocation10 [shape = 's32[1]{0}', space=sflag, size = 0x4, scoped, tag = 'scoped memory for gru_dec_forward.1']
    #allocation11 [shape = 'u8[16384]{0}', space=vmem, size = 0x4000, scoped, tag = 'input window, operand 5, single buffered']
    #allocation12 [shape = 'u8[4096]{0}', space=vmem, size = 0x1000, scoped, tag = 'output window, operand 1, single buffered']
    %14 = vsyncpa [#allocation4], 0
    %15 = vsyncpa [#allocation7], 0
    %16 = vsyncpa [#allocation10], 0
    %17 = vsyncpa [#allocation5], 0
    // Predicated region
    $region2: #{gru_dec_forward.1} parent=1 // pred_check
      _
    $region3: #{gru_dec_forward.1} parent=1 // pred_check_branch
      %19 = sbr.rel (0) target = $region5
    $region4: #{gru_dec_forward.1} parent=1 // pred_region
      %21 = vsyncadd [#allocation4], 0
      %s23 = sshll.u32 %s0, 4
      %s24 = int_to_ptr.hbm [resolvable:$true] %s23
      %s25 = sshll.u32 [#allocation3], 4
      %s26 = int_to_ptr.vmem [resolvable:$true] %s25
      %28 = dma.hbm_to_vmem [thread:$0]  %s24, 128, %s26, [#allocation4]
    $region5: #{gru_dec_forward.1} parent=1 // pred_fallthru
      _
    // Predicated region
    $region6: #{gru_dec_forward.1} parent=1 // pred_check
      _
    $region7: #{gru_dec_forward.1} parent=1 // pred_check_branch
      %30 = sbr.rel (0) target = $region9
    $region8: #{gru_dec_forward.1} parent=1 // pred_region
      %32 = vsyncadd [#allocation7], 0
      %s34 = sshll.u32 %s1, 4
      %s35 = int_to_ptr.hbm [resolvable:$true] %s34
      %s36 = sshll.u32 [#allocation6], 4
      %s37 = int_to_ptr.vmem [resolvable:$true] %s36
      %39 = dma.hbm_to_vmem [thread:$0]  %s35, 128, %s37, [#allocation7]
    $region9: #{gru_dec_forward.1} parent=1 // pred_fallthru
      _
    // Predicated region
    $region10: #{gru_dec_forward.1} parent=1 // pred_check
      _
    $region11: #{gru_dec_forward.1} parent=1 // pred_check_branch
      %41 = sbr.rel (0) target = $region13
    $region12: #{gru_dec_forward.1} parent=1 // pred_region
      %43 = vsyncadd [#allocation7], 0
      %s44 = sshll.u32 %s2, 4
      %s45 = int_to_ptr.hbm [resolvable:$true] %s44
      %s46 = sshll.u32 [#allocation8], 4
      %s47 = int_to_ptr.vmem [resolvable:$true] %s46
      %52 = dma.hbm_to_vmem [thread:$0]  %s45, 256, %s47, [#allocation7], 128, 128, 8
    $region13: #{gru_dec_forward.1} parent=1 // pred_fallthru
      _
    // Predicated region
    $region14: #{gru_dec_forward.1} parent=1 // pred_check
      _
    $region15: #{gru_dec_forward.1} parent=1 // pred_check_branch
      %54 = sbr.rel (0) target = $region17
    $region16: #{gru_dec_forward.1} parent=1 // pred_region
      %56 = vsyncadd [#allocation10], 0
      %s57 = sshll.u32 %s3, 4
      %s58 = int_to_ptr.hbm [resolvable:$true] %s57
      %s59 = sshll.u32 [#allocation9], 4
      %s60 = int_to_ptr.vmem [resolvable:$true] %s59
      %65 = dma.hbm_to_vmem [thread:$0]  %s58, 512, %s60, [#allocation10], 128, 128, 8
    $region17: #{gru_dec_forward.1} parent=1 // pred_fallthru
      _
    // Predicated region
    $region18: #{gru_dec_forward.1} parent=1 // pred_check
      _
    $region19: #{gru_dec_forward.1} parent=1 // pred_check_branch
      %67 = sbr.rel (0) target = $region21
    $region20: #{gru_dec_forward.1} parent=1 // pred_region
      _
    $region21: #{gru_dec_forward.1} parent=1 // pred_fallthru
      _
    // Predicated region
    $region22: #{gru_dec_forward.1} parent=1 // pred_check
      _
    $region23: #{gru_dec_forward.1} parent=1 // pred_check_branch
      %69 = sbr.rel (0) target = $region25
    $region24: #{gru_dec_forward.1} parent=1 // pred_region
      %71 = vsyncadd [#allocation10], 0
      %s72 = sshll.u32 %s5, 4
      %s73 = int_to_ptr.hbm [resolvable:$true] %s72
      %s74 = sshll.u32 [#allocation11], 4
      %s75 = int_to_ptr.vmem [resolvable:$true] %s74
      %80 = dma.hbm_to_vmem [thread:$0]  %s73, 512, %s75, [#allocation10], 128, 128, 8
    $region25: #{gru_dec_forward.1} parent=1 // pred_fallthru
      _
    // Predicated region
    $region26: #{gru_dec_forward.1} parent=1 // pred_check
      _
    $region27: #{gru_dec_forward.1} parent=1 // pred_check_branch
      %82 = sbr.rel (0) target = $region29
    $region28: #{gru_dec_forward.1} parent=1 // pred_region
      _
    $region29: #{gru_dec_forward.1} parent=1 // pred_fallthru
      _
    // Predicated region
    $region30: #{gru_dec_forward.1} parent=1 // pred_check
      _
    $region31: #{gru_dec_forward.1} parent=1 // pred_check_branch
      %84 = sbr.rel (0) target = $region33
    $region32: #{gru_dec_forward.1} parent=1 // pred_region
      %86 = dma.done [#allocation4], 128
    $region33: #{gru_dec_forward.1} parent=1 // pred_fallthru
      _
    // Predicated region
    $region34: #{gru_dec_forward.1} parent=1 // pred_check
      _
    $region35: #{gru_dec_forward.1} parent=1 // pred_check_branch
      %88 = sbr.rel (0) target = $region37
    $region36: #{gru_dec_forward.1} parent=1 // pred_region
      %90 = dma.done [#allocation7], 128
    $region37: #{gru_dec_forward.1} parent=1 // pred_fallthru
      _
    // Predicated region
    $region38: #{gru_dec_forward.1} parent=1 // pred_check
      _
    $region39: #{gru_dec_forward.1} parent=1 // pred_check_branch
      %92 = sbr.rel (0) target = $region41
    $region40: #{gru_dec_forward.1} parent=1 // pred_region
      %94 = dma.done [#allocation7], 256
    $region41: #{gru_dec_forward.1} parent=1 // pred_fallthru
      _
    // Predicated region
    $region42: #{gru_dec_forward.1} parent=1 // pred_check
      _
    $region43: #{gru_dec_forward.1} parent=1 // pred_check_branch
      %96 = sbr.rel (0) target = $region45
    $region44: #{gru_dec_forward.1} parent=1 // pred_region
      %98 = dma.done [#allocation10], 512
    $region45: #{gru_dec_forward.1} parent=1 // pred_fallthru
      _
    // Predicated region
    $region46: #{gru_dec_forward.1} parent=1 // pred_check
      _
    $region47: #{gru_dec_forward.1} parent=1 // pred_check_branch
      %100 = sbr.rel (0) target = $region49
    $region48: #{gru_dec_forward.1} parent=1 // pred_region
      %102 = dma.done [#allocation10], 512
    $region49: #{gru_dec_forward.1} parent=1 // pred_fallthru
      _
    %p103 = scmp.eq.s32.totalorder 0, 0
    // Predicated region
    $region50: #{gru_dec_forward.1} parent=1 // pred_check
      %p104 = pneg %p103
    $region51: #{gru_dec_forward.1} parent=1 // pred_check_branch
      %106 = sbr.rel (%p104) target = $region53
    $region52: #{gru_dec_forward.1} parent=1 // pred_region
      %v107 = vld [vmem:[#allocation6] sm:$0xff]
      %vm108 = vcmask 261120
      %109 = vst.msk [vmem:[#allocation2] sm:$0xff] %vm108, %v107
    $region53: #{gru_dec_forward.1} parent=1 // pred_fallthru
      _
    %v110 = vld [vmem:[#allocation3] sm:$0xff]
    %v111 = vld [vmem:[#allocation2] sm:$0xff]
    %v112 = vld [vmem:[%s4] sm:$0x3]
    %v113 = vld [vmem:[#allocation8] sm:$0xff]
    %v114 = vld [vmem:[#allocation8 + $0x8] sm:$0x3]
    %v115 = vperm.slane %v112, 0
    %vm116 = vcmask 80896
    %v118 = vsel %vm116, %v110, 0
    %vm120 = vcmask 1041408
    %v122 = vsel %vm120, %v114, 0
    %124 = vmatpush.msra.mxu0 0.0
    %125 = vmatpush.msra.mxu0 0.0
    %126 = vmatpush.msra.mxu0 0.0
    %127 = vmatpush.msra.mxu0 0.0
    %128 = vmatpush.msra.mxu0 0.0
    %129 = vmatpush.msra.mxu0 0.0
    %130 = vmatpush.msra.mxu0 0.0
    %131 = vmatpush.msra.mxu0 0.0
    %132 = vmatpush.msra.mxu0 0.0
    %133 = vmatpush.msra.mxu0 0.0
    %134 = vmatpush.msra.mxu0 0.0
    %135 = vmatpush.msra.mxu0 0.0
    %136 = vmatpush.msra.mxu0 0.0
    %137 = vmatpush.msra.mxu0 0.0
    %138 = vmatpush.msra.mxu0 %v122
    %139 = vmatpush.msra.mxu0 %v113
    %140 = vmatmul.f32.gmra.mxu0 %v118
    %v141 = vpop.f32.mrf.mxu0
    %v142 = vadd.f32 %v115, %v141
    %143 = vdwg.mxu0
    %v144 = vld [vmem:[#allocation9] sm:$0xff]
    %v145 = vld [vmem:[#allocation9 + $0x8] sm:$0xff]
    %v146 = vld [vmem:[#allocation9 + $0x10] sm:$0xff]
    %v147 = vld [vmem:[#allocation9 + $0x18] sm:$0xff]
    %v148 = vperm.slane %v112, 1
    %vm149 = vcmask 261120
    %v151 = vsel %vm149, %v111, 0
    %153 = vmatpush.msra.mxu0 0.0
    %154 = vmatpush.msra.mxu0 0.0
    %155 = vmatpush.msra.mxu0 0.0
    %156 = vmatpush.msra.mxu0 0.0
    %157 = vmatpush.msra.mxu0 0.0
    %158 = vmatpush.msra.mxu0 0.0
    %159 = vmatpush.msra.mxu0 0.0
    %160 = vmatpush.msra.mxu0 0.0
    %161 = vmatpush.msra.mxu0 0.0
    %162 = vmatpush.msra.mxu0 0.0
    %163 = vmatpush.msra.mxu0 0.0
    %164 = vmatpush.msra.mxu0 0.0
    %165 = vmatpush.msra.mxu0 %v147
    %166 = vmatpush.msra.mxu0 %v146
    %167 = vmatpush.msra.mxu0 %v145
    %168 = vmatpush.msra.mxu0 %v144
    %169 = vmatmul.f32.gmra.mxu0 %v151
    %v170 = vpop.f32.mrf.mxu0
    %v171 = vadd.f32 %v148, %v170
    %172 = vdwg.mxu0
    %v173 = vadd.f32 %v142, %v171
    %v174 = vxor.u32 %v173, 2147483648
    %v175 = vmul.f32 %v174, 1.442695
    %v176 = vpow.pop %v175
    %v177 = vadd.f32 %v176, 1.0
    %v178 = vrcp.pop %v177
    %v179 = vmul.f32 %v177, %v178
    %v180 = vsub.f32 1.0, %v179
    %v181 = vmul.f32 %v178, %v180
    %v182 = vadd.f32 %v178, %v181
    %vm183 = vweird.f32 %v177
    %vm184 = vweird.f32 %v178
    %vm185 = vmor %vm183, %vm184
    %v186 = vsel %vm185, %v178, %v182
    %v187 = vand.u32 2147483647, %v177
    %vm188 = vcmp.eq.f32.partialorder %v187, 8.507059e+37
    %v189 = vand.u32 %v177, 2147483648
    %v190 = vor.u32 1.1754944e-38, %v189
    %v191 = vsel %vm188, %v190, %v186
    %v192 = vmul.f32 1.0, %v191
    %194 = vrot.lane.b32.xlu0 %v171, 64
    %v195 = vpop.permute.xlu0 %194
    %v197 = vmul.f32 %v192, %v195
    %199 = vrot.lane.b32.xlu0 %v197, 64
    %v200 = vpop.permute.xlu0 %199
    %v202 = vadd.f32 %v142, %v200
    %v203 = vtanh.pop %v202
    %v204 = vsub.f32 1.0, %v192
    %206 = vrot.lane.b32.xlu0 %v203, 96
    %v207 = vpop.permute.xlu0 %206
    %v209 = vmul.f32 %v204, %v207
    %210 = vrot.lane.b32.xlu0 %v111, 32
    %v211 = vpop.permute.xlu0 %210
    %v213 = vmul.f32 %v192, %v211
    %v214 = vadd.f32 %v209, %v213
    %v215 = vld [vmem:[#allocation11] sm:$0xff]
    %v216 = vld [vmem:[#allocation11 + $0x8] sm:$0xff]
    %v217 = vld [vmem:[#allocation11 + $0x10] sm:$0xff]
    %v218 = vld [vmem:[#allocation11 + $0x18] sm:$0xff]
    %v219 = vld [vmem:[%s6] sm:$0x1]
    %v221 = vperm.slane %v219, 0
    %224 = vrot.lane.b32.xlu0 %v214, 96
    %v225 = vpop.permute.xlu0 %224
    %v226 = vsel %vm149, %v225, 0
    %228 = vmatpush.msra.mxu0 0.0
    %229 = vmatpush.msra.mxu0 0.0
    %230 = vmatpush.msra.mxu0 0.0
    %231 = vmatpush.msra.mxu0 0.0
    %232 = vmatpush.msra.mxu0 0.0
    %233 = vmatpush.msra.mxu0 0.0
    %234 = vmatpush.msra.mxu0 0.0
    %235 = vmatpush.msra.mxu0 0.0
    %236 = vmatpush.msra.mxu0 0.0
    %237 = vmatpush.msra.mxu0 0.0
    %238 = vmatpush.msra.mxu0 0.0
    %239 = vmatpush.msra.mxu0 0.0
    %240 = vmatpush.msra.mxu0 %v218
    %241 = vmatpush.msra.mxu0 %v217
    %242 = vmatpush.msra.mxu0 %v216
    %243 = vmatpush.msra.mxu0 %v215
    %244 = vmatmul.f32.gmra.mxu0 %v226
    %v245 = vpop.f32.mrf.mxu0
    %v246 = vadd.f32 %v221, %v245
    %247 = vdwg.mxu0
    %248 = vmax.xlane.f32.xlu0 %v246
    %v249 = vpop.xlane.xlu0 %248
    %v250 = vsub.f32 %v246, %v249
    %v251 = vmul.f32 %v250, 1.442695
    %v252 = vpow.pop %v251
    %253 = vadd.xlane.f32.xlu0 %v252
    %v254 = vpop.xlane.xlu0 %253
    %v255 = vlog2.pop %v254
    %v256 = vmul.f32 %v255, 0.6931472
    %v257 = vsub.f32 %v250, %v256
    %258 = vst [vmem:[%s7] sm:$0xff] %v257
    %260 = vst.msk [vmem:[#allocation2] sm:$0xff] %vm149, %v225
    // Predicated region
    $region54: #{gru_dec_forward.1} parent=1 // pred_check
      %p261 = pneg %p103
    $region55: #{gru_dec_forward.1} parent=1 // pred_check_branch
      %263 = sbr.rel (%p261) target = $region57
    $region56: #{gru_dec_forward.1} parent=1 // pred_region
      %264 = vst.msk [vmem:[#allocation12] sm:$0xff] %vm149, %v225
    $region57: #{gru_dec_forward.1} parent=1 // pred_fallthru
      _
    // Predicated region
    $region58: #{gru_dec_forward.1} parent=1 // pred_check
      _
    $region59: #{gru_dec_forward.1} parent=1 // pred_check_branch
      %266 = sbr.rel (0) target = $region61
    $region60: #{gru_dec_forward.1} parent=1 // pred_region
      _
    $region61: #{gru_dec_forward.1} parent=1 // pred_fallthru
      _
    // Predicated region
    $region62: #{gru_dec_forward.1} parent=1 // pred_check
      _
    $region63: #{gru_dec_forward.1} parent=1 // pred_check_branch
      %268 = sbr.rel (0) target = $region65
    $region64: #{gru_dec_forward.1} parent=1 // pred_region
      %270 = vsyncadd [#allocation5], 0
      %s272 = sshll.u32 [#allocation12], 4
      %s273 = int_to_ptr.vmem [resolvable:$true] %s272
      %s274 = sshll.u32 %s8, 4
      %s275 = int_to_ptr.hbm [resolvable:$true] %s274
      %277 = dma.vmem_to_hbm [thread:$0]  %s273, 128, %s275, [#allocation5]
    $region65: #{gru_dec_forward.1} parent=1 // pred_fallthru
      _
    // Predicated region
    $region66: #{gru_dec_forward.1} parent=1 // pred_check
      _
    $region67: #{gru_dec_forward.1} parent=1 // pred_check_branch
      %279 = sbr.rel (0) target = $region69
    $region68: #{gru_dec_forward.1} parent=1 // pred_region
      _
    $region69: #{gru_dec_forward.1} parent=1 // pred_fallthru
      _
    // Predicated region
    $region70: #{gru_dec_forward.1} parent=1 // pred_check
      _
    $region71: #{gru_dec_forward.1} parent=1 // pred_check_branch
      %281 = sbr.rel (0) target = $region73
    $region72: #{gru_dec_forward.1} parent=1 // pred_region
      %283 = dma.done [#allocation5], 128
    $region73: #{gru_dec_forward.1} parent=1 // pred_fallthru
      _
    %284 = vsyncpa [#allocation4], 1
    %285 = vsyncpa [#allocation7], 1
    %286 = vsyncpa [#allocation10], 1
    %287 = vsyncpa [#allocation5], 1

</llo_original>
